<compile_context>
chip_gen: v7x
topology: tpu7x:2x2x1
jax: 0.10.0
libtpu: 0.0.40
codegen_flags: <defaults>
</compile_context>

<pallas_src>
import math

import jax
import jax.numpy as jnp
from jax.experimental import pallas as pl
from jax.experimental.pallas import tpu as pltpu

_LANE = 128


def _round_up(x, m):
    return ((x + m - 1) // m) * m


def _sublane_multiple(dtype):
    # f32 -> 8 rows per vreg tile, bf16 -> 16, int8/fp8 -> 32.
    return max(8, 32 // jnp.dtype(dtype).itemsize)


def _tpu_vmem_bytes():
    try:
        return int(pltpu.get_tpu_info().vmem_capacity_bytes)
    except Exception:
        return 64 * 1024 * 1024  # conservative fallback (v7x per-TensorCore VMEM)


# ------------------------------- kernels ------------------------------------


def _linear_se3_kernel_resident(deg_ids_ref, w_ref, x_ref, o_ref):
    # Whole weight stack resident in VMEM (constant block index -> fetched once);
    # select this lane-tile's degree from the scalar-prefetched SMEM table.
    d = deg_ids_ref[pl.program_id(0)]
    o_ref[...] = jnp.dot(
        w_ref[d], x_ref[...], preferred_element_type=jnp.float32
    ).astype(o_ref.dtype)


def _linear_se3_kernel_blocked(deg_ids_ref, w_ref, x_ref, o_ref):
    # Fallback for big fibers: per-tile weight block DMA'd via the data-dependent
    # index_map (deg_ids only consumed by the index_map).
    del deg_ids_ref
    o_ref[...] = jnp.dot(
        w_ref[...], x_ref[...], preferred_element_type=jnp.float32
    ).astype(o_ref.dtype)


# ----------------------------- slab-level API --------------------------------


def linear_se3_apply_slab(w_stack, x_slab, deg_ids, *, lane_tile, out_dtype,
                          weights_resident=True, pipeline_depth=2,
                          vmem_limit_bytes=None):
    """Fused per-degree linear on a packed slab.

    w_stack: (D, C_out_p, C_in_p)   stacked, zero-padded per-degree weights
    x_slab:  (C_in_p, total_lanes)  lane-dense activations, total_lanes % lane_tile == 0
    deg_ids: (total_lanes // lane_tile,) int32, lane-tile -> degree index
    Returns: (C_out_p, total_lanes) in out_dtype.
    """
    n_deg, c_out_p, c_in_p = w_stack.shape
    total_lanes = x_slab.shape[1]
    num_tiles = total_lanes // lane_tile
    assert num_tiles * lane_tile == total_lanes
    assert lane_tile % _LANE == 0
    assert deg_ids.shape == (num_tiles,)

    in_sz = jnp.dtype(w_stack.dtype).itemsize
    out_sz = jnp.dtype(out_dtype).itemsize
    if vmem_limit_bytes is None:
        vmem_limit_bytes = 32 * 1024 * 1024

    # Advisory cost hint so XLA schedules neighbors around this mem-bound call.
    flops = 2 * c_out_p * c_in_p * total_lanes
    w_bytes = (n_deg if weights_resident else num_tiles) * c_out_p * c_in_p * in_sz
    bytes_accessed = (
        c_in_p * total_lanes * jnp.dtype(x_slab.dtype).itemsize
        + w_bytes
        + c_out_p * total_lanes * out_sz
    )
    cost = pl.CostEstimate(flops=flops, transcendentals=0,
                           bytes_accessed=bytes_accessed)

    stream_kwargs = {}
    if pipeline_depth and int(pipeline_depth) != 2:
        # Deeper pipelining for tiny lane tiles (hides DMA latency without padding).
        stream_kwargs["pipeline_mode"] = pl.Buffered(int(pipeline_depth))

    if weights_resident:
        kernel = _linear_se3_kernel_resident
        # Constant block index -> the whole (D, C_out_p, C_in_p) stack is fetched once.
        w_spec = pl.BlockSpec((n_deg, c_out_p, c_in_p), lambda t, deg: (0, 0, 0))
    else:
        kernel = _linear_se3_kernel_blocked
        # Data-dependent degree block (leading degree dim squeezed away).
        w_spec = pl.BlockSpec((None, c_out_p, c_in_p), lambda t, deg: (deg[t], 0, 0))

    grid_spec = pltpu.PrefetchScalarGridSpec(
        num_scalar_prefetch=1,
        grid=(num_tiles,),
        in_specs=[
            w_spec,
            # 128-aligned lane-dense column tile of the activation slab.
            pl.BlockSpec((c_in_p, lane_tile), lambda t, deg: (0, t), **stream_kwargs),
        ],
        out_specs=pl.BlockSpec((c_out_p, lane_tile), lambda t, deg: (0, t),
                               **stream_kwargs),
    )

    return pl.pallas_call(
        kernel,
        out_shape=jax.ShapeDtypeStruct((c_out_p, total_lanes), out_dtype),
        grid_spec=grid_spec,
        compiler_params=pltpu.CompilerParams(
            dimension_semantics=("parallel",),   # lane tiles independent -> megacore
            vmem_limit_bytes=int(vmem_limit_bytes),
        ),
        cost_estimate=cost,
    )(deg_ids, w_stack, x_slab)


# --------------------------- tiling / VMEM planning --------------------------


def _plan_tiling(n_deg, c_in_p, c_out_p, max_lanes, compute_dtype, out_dtype,
                 lane_tile, pipeline_depth):
    in_sz = jnp.dtype(compute_dtype).itemsize
    out_sz = jnp.dtype(out_dtype).itemsize
    vmem = _tpu_vmem_bytes()
    is_small_vmem = vmem <= 64 * 1024 * 1024       # v7x: 64 MiB physical per TC
    budget = vmem // 2                             # scoped-VMEM ceiling we allow
    tile_budget = (budget * 3) // 5                # headroom for compiler scratch

    # Weight footprint is part of the VMEM accounting.
    w_total = n_deg * c_out_p * c_in_p * in_sz
    weights_resident = w_total <= min(4 * 1024 * 1024, max(tile_budget // 4, _LANE))
    w_foot = 2 * (w_total if weights_resident else c_out_p * c_in_p * in_sz)

    bytes_per_lane = c_in_p * in_sz + c_out_p * out_sz
    bufs = max(2, int(pipeline_depth))

    if lane_tile is None:
        # Per-tile HBM traffic target: a few microseconds of DMA so the ~0.35us
        # per-grid-step fixed cost is amortized.  v7x HBM (~3.2 TB/s) drains tiles
        # ~2.3x faster than v6e -> target proportionally larger tiles there.
        target_tile_bytes = (4 << 20) if is_small_vmem else (2 << 20)
        lane_tile = _round_up(max(_LANE, target_tile_bytes // bytes_per_lane), _LANE)
        lane_tile = min(lane_tile, 16384)
        # Never larger than the biggest degree actually needs (padding waste).
        lane_tile = min(lane_tile, _round_up(max_lanes, _LANE))
        # Keep several tiles in flight: >=4 on v7x (feed both TensorCores plus
        # double buffering), >=2 elsewhere, when the workload is big enough.
        min_tiles = 4 if is_small_vmem else 2
        if _round_up(max_lanes, _LANE) >= min_tiles * _LANE:
            lane_tile = min(lane_tile, _round_up(-(-max_lanes // min_tiles), _LANE))
        lane_tile = max(lane_tile, _LANE)
        # Clamp so buffered X/out tiles + weight buffers fit the VMEM budget.
        while lane_tile > _LANE and w_foot + bufs * lane_tile * bytes_per_lane > tile_budget:
            lane_tile -= _LANE

    assert lane_tile % _LANE == 0
    footprint = w_foot + bufs * lane_tile * bytes_per_lane
    vmem_limit = int(min(budget, max(16 * 1024 * 1024, 2 * footprint + (4 << 20))))
    return int(lane_tile), weights_resident, vmem_limit


# ----------------------------- pack / unpack ---------------------------------


def _pack_features(features, degrees, c_in_p, lane_tile, compute_dtype):
    """Build ONE lane-dense slab X[c_in_p, total_lanes]: each degree's (N, C_in, M)
    is transposed once and written into a preallocated zero slab with
    dynamic_update_slice (no per-degree pad + concatenate passes)."""
    layouts, deg_ids = [], []
    col = 0
    for idx, d in enumerate(degrees):
        n, c_in, m = features[str(d)].shape
        lanes = n * m
        lanes_pad = _round_up(lanes, lane_tile)
        layouts.append((str(d), n, m, c_in, lanes, col))
        deg_ids.extend([idx] * (lanes_pad // lane_tile))
        col += lanes_pad
    total_lanes = col
    slab = jnp.zeros((c_in_p, total_lanes), dtype=compute_dtype)
    for key, n, m, c_in, lanes, col0 in layouts:
        x2 = jnp.transpose(features[key], (1, 0, 2)).reshape(c_in, lanes)
        slab = jax.lax.dynamic_update_slice(slab, x2.astype(compute_dtype), (0, col0))
    return slab, jnp.asarray(deg_ids, dtype=jnp.int32), layouts


def _pack_weights(weights, degrees, c_out_p, c_in_p, compute_dtype):
    blocks = []
    for d in degrees:
        w = weights[str(d)]
        c_out, c_in = w.shape
        blocks.append(jnp.pad(w, ((0, c_out_p - c_out), (0, c_in_p - c_in))))
    return jnp.stack(blocks, axis=0).astype(compute_dtype)


def _unpack_output(out_slab, layouts, weights, out_dtype):
    outs = {}
    for key, n, m, c_in, lanes, col in layouts:
        c_out = weights[key].shape[0]
        seg = out_slab[:c_out, col:col + lanes]
        outs[key] = jnp.transpose(seg.reshape(c_out, n, m), (1, 0, 2)).astype(out_dtype)
    return outs


# ------------------------------ public forward -------------------------------


def linear_se3_forward(weights, features, *, compute_dtype=None, out_dtype=None,
                       lane_tile=None, pipeline_depth=2):
    """weights: dict str(degree) -> (C_out, C_in);
    features: dict str(degree) -> (N, C_in, 2*degree+1).
    Returns dict str(degree) -> (N, C_out, 2*degree+1), matching PyTorch
    LinearSE3.forward (per-degree W @ x, no bias, no cross-degree mixing)."""
    degrees = sorted(int(d) for d in weights.keys())
    feat_dtype = features[str(degrees[0])].dtype
    if compute_dtype is None:
        compute_dtype = feat_dtype   # f32 default; pass bf16 to halve HBM bytes
    if out_dtype is None:
        out_dtype = feat_dtype

    sub = max(_sublane_multiple(compute_dtype), _sublane_multiple(out_dtype))
    c_in_p = _round_up(
        max(max(features[str(d)].shape[1] for d in degrees),
            max(weights[str(d)].shape[1] for d in degrees)), sub)
    c_out_p = _round_up(max(weights[str(d)].shape[0] for d in degrees), sub)
    max_lanes = max(
        features[str(d)].shape[0] * features[str(d)].shape[2] for d in degrees
    )

    lane_tile, weights_resident, vmem_limit = _plan_tiling(
        len(degrees), c_in_p, c_out_p, max_lanes, compute_dtype, out_dtype,
        lane_tile, pipeline_depth)

    x_slab, deg_ids, layouts = _pack_features(
        features, degrees, c_in_p, lane_tile, compute_dtype)
    w_stack = _pack_weights(weights, degrees, c_out_p, c_in_p, compute_dtype)

    out_slab = linear_se3_apply_slab(
        w_stack, x_slab, deg_ids,
        lane_tile=lane_tile, out_dtype=out_dtype,
        weights_resident=weights_resident, pipeline_depth=pipeline_depth,
        vmem_limit_bytes=vmem_limit)

    return _unpack_output(out_slab, layouts, weights, out_dtype)


def init_linear_se3_weights(key, fiber_in, fiber_out, dtype=jnp.float32):
    """Deterministic init matching torch.randn(C_out, C_in) / sqrt(C_in)."""
    weights = {}
    for degree_out, channels_out in sorted(fiber_out.items()):
        c_in = fiber_in[degree_out]
        key, sub = jax.random.split(key)
        weights[str(degree_out)] = (
            jax.random.normal(sub, (channels_out, c_in), dtype=dtype)
            / math.sqrt(c_in)
        )
    return weights


if __name__ == "__main__":
    # Small fiber: degrees {0, 1}, C_in = 16, C_out = 32, N = 8 nodes.
    fiber_in = {0: 16, 1: 16}
    fiber_out = {0: 32, 1: 32}
    N = 8

    key = jax.random.PRNGKey(0)
    wkey, fkey = jax.random.split(key)
    weights = init_linear_se3_weights(wkey, fiber_in, fiber_out)

    features = {}
    for degree, c_in in sorted(fiber_in.items()):
        fkey, sub = jax.random.split(fkey)
        m = 2 * degree + 1
        features[str(degree)] = jax.random.normal(sub, (N, c_in, m), dtype=jnp.float32)

    # f32 compute path (default): exact semantics, tight tolerance.
    out = linear_se3_forward(weights, features)
    out = jax.tree_util.tree_map(jax.block_until_ready, out)
    for deg in weights:
        ref = jnp.einsum("oc,ncm->nom", weights[deg], features[deg])
        assert out[deg].shape == ref.shape, (out[deg].shape, ref.shape)
        assert jnp.allclose(out[deg], ref, atol=1e-4, rtol=1e-4), deg

    # bf16 compute path (opt-in; MXU bf16 fast path with f32 accumulation): looser
    # tolerance because inputs are rounded to bf16 at the kernel boundary.
    out_bf16 = linear_se3_forward(weights, features, compute_dtype=jnp.bfloat16)
    out_bf16 = jax.tree_util.tree_map(jax.block_until_ready, out_bf16)
    for deg in weights:
        ref = jnp.einsum("oc,ncm->nom", weights[deg], features[deg])
        assert jnp.allclose(out_bf16[deg], ref, atol=5e-2, rtol=5e-2), deg

    # Uneven, non-multiple-of-8 channels per degree to exercise the padding path.
    fiber_in2 = {0: 12, 1: 20}
    fiber_out2 = {0: 10, 1: 24}
    w2 = init_linear_se3_weights(jax.random.PRNGKey(1), fiber_in2, fiber_out2)
    f2 = {}
    k2 = jax.random.PRNGKey(2)
    for degree, c_in in sorted(fiber_in2.items()):
        k2, sub = jax.random.split(k2)
        f2[str(degree)] = jax.random.normal(
            sub, (N, c_in, 2 * degree + 1), dtype=jnp.float32
        )
    out2 = linear_se3_forward(w2, f2)
    out2 = jax.tree_util.tree_map(jax.block_until_ready, out2)
    for deg in w2:
        ref = jnp.einsum("oc,ncm->nom", w2[deg], f2[deg])
        assert out2[deg].shape == ref.shape, (out2[deg].shape, ref.shape)
        assert jnp.allclose(out2[deg], ref, atol=1e-4, rtol=1e-4), deg

    print("KERNEL_OK")
</pallas_src>

<mosaic_0001>
module attributes {stable_mosaic.version = 11 : i64} {
  func.func @_linear_se3_kernel_resident(%arg0: i32, %arg1: memref<2xi32, #tpu.memory_space<smem>>, %arg2: memref<2x32x16xf32, #tpu.memory_space<vmem>>, %arg3: memref<16x128xf32, #tpu.memory_space<vmem>>, %arg4: memref<32x128xf32, #tpu.memory_space<vmem>>) attributes {dimension_semantics = [#tpu.dimension_semantics<parallel>], iteration_bounds = array<i64: 2>, scalar_prefetch = 1 : i64, scratch_operands = 0 : i64, tpu.core_type = #tpu.core_type<tc>, window_params = [{pipeline_mode = #tpu.pipeline_mode<synchronous>, transform_indices = @transform_0, window_bounds = array<i64: 2, 32, 16>}, {transform_indices = @transform_1, window_bounds = array<i64: 16, 128>}, {transform_indices = @transform_2, window_bounds = array<i64: 32, 128>}]} {
    %0 = arith.index_cast %arg0 : i32 to index
    %1 = memref.load %arg1[%0] : memref<2xi32, #tpu.memory_space<smem>>
    %2 = arith.index_cast %1 : i32 to index
    %c0 = arith.constant 0 : index
    %c0_0 = arith.constant 0 : index
    %3 = vector.load %arg2[%2, %c0, %c0_0] : memref<2x32x16xf32, #tpu.memory_space<vmem>>, vector<1x32x16xf32>
    %4 = vector.shape_cast %3 : vector<1x32x16xf32> to vector<32x16xf32>
    %c0_1 = arith.constant 0 : index
    %c0_2 = arith.constant 0 : index
    %5 = vector.load %arg3[%c0_1, %c0_2] : memref<16x128xf32, #tpu.memory_space<vmem>>, vector<16x128xf32>
    %cst = arith.constant dense<0.000000e+00> : vector<32x128xf32>
    %6 = tpu.matmul %4, %5, %cst {dimension_numbers = #tpu.dot_dimension_numbers<[1], [0], [0], [1], [0, 0, 1, 1], [], []>} : vector<32x16xf32>, vector<16x128xf32>, vector<32x128xf32> -> vector<32x128xf32>
    %c0_3 = arith.constant 0 : index
    %c0_4 = arith.constant 0 : index
    %7 = vector.load %arg4[%c0_3, %c0_4] : memref<32x128xf32, #tpu.memory_space<vmem>>, vector<32x128xf32>
    tpu.vector_store %arg4[%c0_3, %c0_4], %6 {strides = array<i32>} : memref<32x128xf32, #tpu.memory_space<vmem>>, vector<32x128xf32>,
    return
  }
  func.func @transform_0(%arg0: i32, %arg1: memref<2xi32, #tpu.memory_space<smem>>) -> (i32, i32, i32) {
    %c0_i32 = arith.constant 0 : i32
    %c0_i32_0 = arith.constant 0 : i32
    %c0_i32_1 = arith.constant 0 : i32
    %c0_i32_2 = arith.constant 0 : i32
    return %c0_i32, %c0_i32_0, %c0_i32_1 : i32, i32, i32
  }
  func.func @transform_1(%arg0: i32, %arg1: memref<2xi32, #tpu.memory_space<smem>>) -> (i32, i32) {
    %c0_i32 = arith.constant 0 : i32
    %c0_i32_0 = arith.constant 0 : i32
    return %c0_i32, %arg0 : i32, i32
  }
  func.func @transform_2(%arg0: i32, %arg1: memref<2xi32, #tpu.memory_space<smem>>) -> (i32, i32) {
    %c0_i32 = arith.constant 0 : i32
    %c0_i32_0 = arith.constant 0 : i32
    return %c0_i32, %arg0 : i32, i32
  }
}

</mosaic_0001>

<llo_original>
// kernel: tpu_custom_call.1
$region0: #{tpu_custom_call.1}
  #allocation0 [shape = 'u32[]', space=smem, size = 0x4, offset = 0x4, fixed_abs, tag = 'smem constant byte address 0x4 - core index']
  #allocation1 [shape = 'u32[144,128]{1,0:T(1,128)}', space=vmem, size = 0x12000, scoped, tag = 'internal scratch']
  #allocation2 [shape = 's32[1]{0}', space=sflag, size = 0x4, scoped, tag = 'scoped memory for tpu_custom_call.1']
  #allocation3 [shape = 'u8[512]{0}', space=smem, size = 0x200, scoped, tag = 'prefetched SMEM operand 0']
  %s0 = inlined_call_operand.vmem [shape: s32[2], index: 0, kind: input, shape index: {}]
  %s1 = inlined_call_operand.vmem [shape: f32[2,32,16], index: 1, kind: input, shape index: {}]
  %s2 = inlined_call_operand.vmem [shape: f32[16,256], index: 2, kind: input, shape index: {}]
  %s3 = inlined_call_operand.hbm [shape: f32[32,256], index: 3, kind: output, shape index: {}]
  %s4 = sld [smem:[#allocation0]]
  $region79: #{tpu_custom_call.1} parent=0
    _
  %s6 = ssub.s32 1, %s4
  %s7 = scalar_select 0, %s6, %s4
  %s8 = sshll.u32 %s0, 4
  %s9 = int_to_ptr.vmem [resolvable:$true] %s8
  %11 = dma.vmem_to_smem %s9, 16, [#allocation3], [#allocation2]
  %12 = dma.done [#allocation2], 16
  %13 = sfence
  $region1: #{tpu_custom_call.1} parent=0
    #allocation4 [shape = 'u8[16384]{0}', space=vmem, size = 0x4000, scoped, tag = 'input window, operand 2']
    #allocation5 [shape = 'u8[32768]{0}', space=vmem, size = 0x8000, scoped, tag = 'output window, operand 0']
    #allocation6 [shape = 's32[2]{0}', space=sflag, size = 0x8, scoped, tag = 'scoped memory for tpu_custom_call.1']
    %14 = vsyncpa [#allocation6], 0
    %s15 = scalar_lea.sflag [#allocation6], 1
    %16 = vsyncpa %s15, 0
    loop: start=0, step=1, limit=4
    $region2: #{tpu_custom_call.1} parent=1 // loop_pre_header
      _
    $region3: #{tpu_custom_call.1} parent=1 // loop_header
      %s18 = sphi 0, %s22
      %p19 = scmp.ge.s32.totalorder %s18, 4
      %s26 = sphi 0, %s26
      %s28 = sphi 0, %s26
      %s29 = sphi 0, %s28
      %s43 = sphi 0, %s29
      %s49 = sphi 0, %s51
      %s52 = sphi 0, %s49
      %s53 = sphi 0, %s52
      %s69 = sphi 0, %s53
      %s75 = sphi 0, %s77
      %s78 = sphi 0, %s75
      %s79 = sphi 0, %s78
      %s95 = sphi 0, %s79
    $region4: #{tpu_custom_call.1} parent=1 // loop_header_branch
      %21 = sbr.rel (%p19) target = $region8
    $region5: #{tpu_custom_call.1} parent=1 // loop_body
      %s23 = ssub.s32 %s18, 1
      %s24 = ssub.s32 %s18, 2
      %s25 = sadd.s32 %s18, 1
      %s27 = sadd.s32 %s26, 1
      %p30 = scmp.eq.s32.totalorder %s18, 1
      %p31 = scmp.ne.s32.totalorder %s26, %s28
      %p32 = scmp.eq.s32.totalorder %s18, 0
      %p33 = por %p31, %p32
      %p34 = scmp.ne.s32.totalorder %s26, %s28
      %p35 = scmp.eq.s32.totalorder %s23, 1
      %p36 = por %p34, %p35
      %p37 = scmp.ne.s32.totalorder %s28, %s29
      %p38 = scmp.eq.s32.totalorder %s23, 0
      %p39 = por %p37, %p38
      %p40 = scmp.ne.s32.totalorder %s28, %s29
      %p41 = scmp.eq.s32.totalorder %s24, 1
      %p42 = por %p40, %p41
      %p44 = scmp.ne.s32.totalorder %s29, %s43
      %p45 = scmp.eq.s32.totalorder %s24, 0
      %p46 = por %p44, %p45
      %s47 = ssub.s32 %s18, %s25
      %p48 = scmp.eq.s32.totalorder %s47, 0
      %s50 = sadd.s32 %s49, 1
      %s51 = scalar_select %p48, %s49, %s50
      %p54 = pneg %p48
      %p55 = scmp.eq.s32.totalorder %s18, 1
      %p56 = por %p54, %p55
      %p57 = scmp.ne.s32.totalorder %s49, %s52
      %p58 = scmp.eq.s32.totalorder %s18, 0
      %p59 = por %p57, %p58
      %p60 = scmp.ne.s32.totalorder %s49, %s52
      %p61 = scmp.eq.s32.totalorder %s23, 1
      %p62 = por %p60, %p61
      %p63 = scmp.ne.s32.totalorder %s52, %s53
      %p64 = scmp.eq.s32.totalorder %s23, 0
      %p65 = por %p63, %p64
      %p66 = scmp.ne.s32.totalorder %s52, %s53
      %p67 = scmp.eq.s32.totalorder %s24, 1
      %p68 = por %p66, %p67
      %p70 = scmp.ne.s32.totalorder %s53, %s69
      %p71 = scmp.eq.s32.totalorder %s24, 0
      %p72 = por %p70, %p71
      %s73 = ssub.s32 %s18, %s25
      %p74 = scmp.eq.s32.totalorder %s73, 0
      %s76 = sadd.s32 %s75, 1
      %s77 = scalar_select %p74, %s75, %s76
      %p80 = pneg %p74
      %p81 = scmp.eq.s32.totalorder %s18, 1
      %p82 = por %p80, %p81
      %p83 = scmp.ne.s32.totalorder %s75, %s78
      %p84 = scmp.eq.s32.totalorder %s18, 0
      %p85 = por %p83, %p84
      %p86 = scmp.ne.s32.totalorder %s75, %s78
      %p87 = scmp.eq.s32.totalorder %s23, 1
      %p88 = por %p86, %p87
      %p89 = scmp.ne.s32.totalorder %s78, %s79
      %p90 = scmp.eq.s32.totalorder %s23, 0
      %p91 = por %p89, %p90
      %p92 = scmp.ne.s32.totalorder %s78, %s79
      %p93 = scmp.eq.s32.totalorder %s24, 1
      %p94 = por %p92, %p93
      %p96 = scmp.ne.s32.totalorder %s79, %s95
      %p97 = scmp.eq.s32.totalorder %s24, 0
      %p98 = por %p96, %p97
      %p99 = scmp.le.s32.totalorder 1, %s18
      %p100 = scmp.lt.s32.totalorder %s18, 3
      %p101 = pnand %p99, %p100
      %p102 = pneg %p101
      // Predicated region
      $region9: #{tpu_custom_call.1} parent=5 // pred_check
        _
      $region10: #{tpu_custom_call.1} parent=5 // pred_check_branch
        %104 = sbr.rel (%p101) target = $region12
      $region11: #{tpu_custom_call.1} parent=5 // pred_region
        %s105 = ssub.s32 %s18, 1
        // Predicated region
        $region13: #{tpu_custom_call.1} parent=11 // pred_check
          %p106 = pneg %p39
        $region14: #{tpu_custom_call.1} parent=11 // pred_check_branch
          %108 = sbr.rel (%p106) target = $region16
        $region15: #{tpu_custom_call.1} parent=11 // pred_region
          _
        $region16: #{tpu_custom_call.1} parent=11 // pred_fallthru
          _
      $region12: #{tpu_custom_call.1} parent=5 // pred_fallthru
        _
      %p109 = scmp.lt.s32.totalorder %s18, 2
      // Predicated region
      $region17: #{tpu_custom_call.1} parent=5 // pred_check
        %p110 = pneg %p109
      $region18: #{tpu_custom_call.1} parent=5 // pred_check_branch
        %112 = sbr.rel (%p110) target = $region20
      $region19: #{tpu_custom_call.1} parent=5 // pred_region
        // Predicated region
        $region21: #{tpu_custom_call.1} parent=19 // pred_check
          %p113 = pneg %p59
        $region22: #{tpu_custom_call.1} parent=19 // pred_check_branch
          %115 = sbr.rel (%p113) target = $region24
        $region23: #{tpu_custom_call.1} parent=19 // pred_region
          %s116 = sand.u32 %s49, 1
          %s117 = sand.u32 %s49, 1
          %s118 = smul.addr %s117, 16
          %s119 = scalar_lea.vmem [#allocation4], %s118
          %s120 = smul.addr %s18, 8
          %s121 = scalar_lea.vmem %s2, %s120
          // Predicated region
          $region25: #{tpu_custom_call.1} parent=23 // pred_check
            _
          $region26: #{tpu_custom_call.1} parent=23 // pred_check_branch
            %123 = sbr.rel (0) target = $region28
          $region27: #{tpu_custom_call.1} parent=23 // pred_region
            // Predicated region
            $region29: #{tpu_custom_call.1} parent=27 // pred_check
              _
            $region30: #{tpu_custom_call.1} parent=27 // pred_check_branch
              %125 = sbr.rel (0) target = $region32
            $region31: #{tpu_custom_call.1} parent=27 // pred_region
              // Predicated region
              $region44: #{tpu_custom_call.1} parent=31 // pred_check
                _
              $region45: #{tpu_custom_call.1} parent=31 // pred_check_branch
                %142 = sbr.rel (0) target = $region47
              $region46: #{tpu_custom_call.1} parent=31 // pred_region
                loop: start=0, step=1, limit=1
                $region48: #{tpu_custom_call.1} parent=46 // loop_pre_header
                  _
                $region49: #{tpu_custom_call.1} parent=46 // loop_header
                  %s144 = sphi 0, %s148
                  %p145 = scmp.ge.s32.totalorder %s144, 1
                  %s149 = sphi %s121, %s121
                  %s150 = sphi %s119, %s119
                $region50: #{tpu_custom_call.1} parent=46 // loop_header_branch
                  %147 = sbr.rel (%p145) target = $region54
                $region51: #{tpu_custom_call.1} parent=46 // loop_body
                  %v151 = vld [vmem:[%s149] sm:$0xff]
                  %152 = vst [vmem:[%s150] sm:$0xff] %v151
                  %v153 = vld [vmem:[%s149 + $0x10] sm:$0xff]
                  %154 = vst [vmem:[%s150 + $0x8] sm:$0xff] %v153
                $region52: #{tpu_custom_call.1} parent=46 // loop_footer
                  %s148 = sadd.s32 1, %s144
                $region53: #{tpu_custom_call.1} parent=46 // loop_footer_branch
                  %143 = sbr.rel target = $region49
                $region54: #{tpu_custom_call.1} parent=46 // loop_exit
                  _
              $region47: #{tpu_custom_call.1} parent=31 // pred_fallthru
                _
              // Predicated region
              $region55: #{tpu_custom_call.1} parent=31 // pred_check
                _
              $region56: #{tpu_custom_call.1} parent=31 // pred_check_branch
                %156 = sbr.rel target = $region58
              $region57: #{tpu_custom_call.1} parent=31 // pred_region
                _
              $region58: #{tpu_custom_call.1} parent=31 // pred_fallthru
                _
            $region32: #{tpu_custom_call.1} parent=27 // pred_fallthru
              _
            // Predicated region
            $region33: #{tpu_custom_call.1} parent=27 // pred_check
              _
            $region34: #{tpu_custom_call.1} parent=27 // pred_check_branch
              %127 = sbr.rel target = $region36
            $region35: #{tpu_custom_call.1} parent=27 // pred_region
              loop: start=0, step=1, limit=1
              $region37: #{tpu_custom_call.1} parent=35 // loop_pre_header
                _
              $region38: #{tpu_custom_call.1} parent=35 // loop_header
                %s130 = sphi 0, %s134
                %p131 = scmp.ge.s32.totalorder %s130, 1
                %s135 = sphi %s121, %s121
                %s136 = sphi %s119, %s119
              $region39: #{tpu_custom_call.1} parent=35 // loop_header_branch
                %133 = sbr.rel (%p131) target = $region43
              $region40: #{tpu_custom_call.1} parent=35 // loop_body
                %v137 = vld [vmem:[%s135] sm:$0xff]
                %138 = vst [vmem:[%s136] sm:$0xff] %v137
                %v139 = vld [vmem:[%s135 + $0x10] sm:$0xff]
                %140 = vst [vmem:[%s136 + $0x8] sm:$0xff] %v139
              $region41: #{tpu_custom_call.1} parent=35 // loop_footer
                %s134 = sadd.s32 1, %s130
              $region42: #{tpu_custom_call.1} parent=35 // loop_footer_branch
                %129 = sbr.rel target = $region38
              $region43: #{tpu_custom_call.1} parent=35 // loop_exit
                _
            $region36: #{tpu_custom_call.1} parent=27 // pred_fallthru
              _
          $region28: #{tpu_custom_call.1} parent=23 // pred_fallthru
            _
          %157 = vnop
        $region24: #{tpu_custom_call.1} parent=19 // pred_fallthru
          _
      $region20: #{tpu_custom_call.1} parent=5 // pred_fallthru
        _
      %p158 = scmp.le.s32.totalorder 1, %s18
      %p159 = scmp.lt.s32.totalorder %s18, 3
      %p160 = pnand %p158, %p159
      %p161 = pneg %p160
      // Predicated region
      $region59: #{tpu_custom_call.1} parent=5 // pred_check
        _
      $region60: #{tpu_custom_call.1} parent=5 // pred_check_branch
        %163 = sbr.rel (%p160) target = $region62
      $region61: #{tpu_custom_call.1} parent=5 // pred_region
        %s164 = ssub.s32 %s18, 1
        %s165 = sand.u32 %s52, 1
        %s166 = sand.u32 %s52, 1
        %s167 = smul.addr %s166, 16
        %s168 = scalar_lea.vmem [#allocation4], %s167
        // Predicated region
        $region63: #{tpu_custom_call.1} parent=61 // pred_check
          %p169 = pneg %p65
        $region64: #{tpu_custom_call.1} parent=61 // pred_check_branch
          %171 = sbr.rel (%p169) target = $region66
        $region65: #{tpu_custom_call.1} parent=61 // pred_region
          _
        $region66: #{tpu_custom_call.1} parent=61 // pred_fallthru
          _
        %p172 = pneg %p39
        %p173 = pneg %p36
        %s174 = sand.u32 %s52, 1
        %s175 = sand.u32 %s52, 1
        %s176 = smul.addr %s175, 16
        %s177 = scalar_lea.vmem [#allocation4], %s176
        %p178 = pneg %p65
        %p179 = pneg %p62
        %p180 = pneg %p91
        %p181 = pneg %p88
        %s182 = sand.u32 %s78, 1
        %s183 = scalar_lea.sflag [#allocation6], %s182
        %s184 = sand.u32 %s78, 1
        %s185 = smul.addr %s184, 32
        %s186 = scalar_lea.vmem [#allocation5], %s185
        %s187 = sld [smem:[#allocation3 + %s23]]
        %s188 = smul.u32 %s187, 32
        %s189 = scalar_lea.vmem %s1, %s188
        %v190 = vld [vmem:[%s189] sm:$0xff]
        %v191 = vld [vmem:[%s189 + $0x8] sm:$0xff]
        %v192 = vld [vmem:[%s189 + $0x10] sm:$0xff]
        %v193 = vld [vmem:[%s189 + $0x18] sm:$0xff]
        %v194 = vld [vmem:[%s168] sm:$0xff]
        %v195 = vld [vmem:[%s168 + $0x8] sm:$0xff]
        %vm196 = vcmask 130048
        %v198 = vsel %vm196, %v190, 0
        %v201 = vsel %vm196, %v191, 0
        %v204 = vsel %vm196, %v192, 0
        %v207 = vsel %vm196, %v193, 0
        %209 = vmatprep.subr.mxu0 0.0
        %210 = vmatpush1.msra.mxu0 %v194
        %211 = vmatprep.subr.mxu0 0.0
        %212 = vmatpush1.msra.mxu0 %v195
        %213 = vmatprep.subr.mxu0 0.0
        %214 = vmatpush1.msra.mxu0 0.0
        %215 = vmatprep.subr.mxu0 0.0
        %216 = vmatpush1.msra.mxu0 0.0
        %217 = vmatprep.subr.mxu0 0.0
        %218 = vmatpush1.msra.mxu0 0.0
        %219 = vmatprep.subr.mxu0 0.0
        %220 = vmatpush1.msra.mxu0 0.0
        %221 = vmatprep.subr.mxu0 0.0
        %222 = vmatpush1.msra.mxu0 0.0
        %223 = vmatprep.subr.mxu0 0.0
        %224 = vmatpush1.msra.mxu0 0.0
        %225 = vmatprep.subr.mxu0 0.0
        %226 = vmatpush1.msra.mxu0 0.0
        %227 = vmatprep.subr.mxu0 0.0
        %228 = vmatpush1.msra.mxu0 0.0
        %229 = vmatprep.subr.mxu0 0.0
        %230 = vmatpush1.msra.mxu0 0.0
        %231 = vmatprep.subr.mxu0 0.0
        %232 = vmatpush1.msra.mxu0 0.0
        %233 = vmatprep.subr.mxu0 0.0
        %234 = vmatpush1.msra.mxu0 0.0
        %235 = vmatprep.subr.mxu0 0.0
        %236 = vmatpush1.msra.mxu0 0.0
        %237 = vmatprep.subr.mxu0 0.0
        %238 = vmatpush1.msra.mxu0 0.0
        %239 = vmatprep.subr.mxu0 0.0
        %240 = vmatpush1.msra.mxu0 0.0
        %241 = vmatprep.subr.mxu0 0.0
        %242 = vmatpush1.msra.mxu0 0.0
        %243 = vmatprep.subr.mxu0 0.0
        %244 = vmatpush1.msra.mxu0 0.0
        %245 = vmatprep.subr.mxu0 0.0
        %246 = vmatpush1.msra.mxu0 0.0
        %247 = vmatprep.subr.mxu0 0.0
        %248 = vmatpush1.msra.mxu0 0.0
        %249 = vmatprep.subr.mxu0 0.0
        %250 = vmatpush1.msra.mxu0 0.0
        %251 = vmatprep.subr.mxu0 0.0
        %252 = vmatpush1.msra.mxu0 0.0
        %253 = vmatprep.subr.mxu0 0.0
        %254 = vmatpush1.msra.mxu0 0.0
        %255 = vmatprep.subr.mxu0 0.0
        %256 = vmatpush1.msra.mxu0 0.0
        %257 = vmatprep.subr.mxu0 0.0
        %258 = vmatpush1.msra.mxu0 0.0
        %259 = vmatprep.subr.mxu0 0.0
        %260 = vmatpush1.msra.mxu0 0.0
        %261 = vmatprep.subr.mxu0 0.0
        %262 = vmatpush1.msra.mxu0 0.0
        %263 = vmatprep.subr.mxu0 0.0
        %264 = vmatpush1.msra.mxu0 0.0
        %265 = vmatprep.subr.mxu0 0.0
        %266 = vmatpush1.msra.mxu0 0.0
        %267 = vmatprep.subr.mxu0 0.0
        %268 = vmatpush1.msra.mxu0 0.0
        %269 = vmatprep.subr.mxu0 0.0
        %270 = vmatpush1.msra.mxu0 0.0
        %271 = vmatprep.subr.mxu0 0.0
        %272 = vmatpush1.msra.mxu0 0.0
        %273 = vmatprep.mubr.f32.mxu0 0.0
        %274 = vmatmul.mubr.f32.gmra.mrb[0].mxu0 %v198
        %v275 = vpop.f32.mrb[0].mxu0
        %v276 = vadd.f32 0.0, %v275
        %v277 = vpop.f32.mrb[0].mxu0
        %278 = vmatprep.mubr.f32.mxu0 0.0
        %279 = vmatmul.mubr.f32.gmra.mrb[0].mxu0 %v201
        %v280 = vpop.f32.mrb[0].mxu0
        %v281 = vadd.f32 0.0, %v280
        %v282 = vpop.f32.mrb[0].mxu0
        %283 = vmatprep.mubr.f32.mxu0 0.0
        %284 = vmatmul.mubr.f32.gmra.mrb[0].mxu0 %v204
        %v285 = vpop.f32.mrb[0].mxu0
        %v286 = vadd.f32 0.0, %v285
        %v287 = vpop.f32.mrb[0].mxu0
        %288 = vmatprep.mubr.f32.mxu0 0.0
        %289 = vmatmul.mubr.f32.gmra.mrb[0].mxu0 %v207
        %v290 = vpop.f32.mrb[0].mxu0
        %v291 = vadd.f32 0.0, %v290
        %v292 = vpop.f32.mrb[0].mxu0
        %293 = vdwg.mxu0
        %294 = vst [vmem:[%s186] sm:$0xff] %v276
        %295 = vst [vmem:[%s186 + $0x8] sm:$0xff] %v281
        %296 = vst [vmem:[%s186 + $0x10] sm:$0xff] %v286
        %297 = vst [vmem:[%s186 + $0x18] sm:$0xff] %v291
        %s298 = sand.u32 %s78, 1
        %s299 = scalar_lea.sflag [#allocation6], %s298
        %s300 = sand.u32 %s78, 1
        %s301 = smul.addr %s300, 32
        %s302 = scalar_lea.vmem [#allocation5], %s301
        // Predicated region
        $region67: #{tpu_custom_call.1} parent=61 // pred_check
          %p303 = pneg %p88
        $region68: #{tpu_custom_call.1} parent=61 // pred_check_branch
          %305 = sbr.rel (%p303) target = $region70
        $region69: #{tpu_custom_call.1} parent=61 // pred_region
          %s307 = ssub.s32 512, 512
          %308 = vsyncadd %s299, %s307
          %s309 = smul.addr %s23, 128
          %s310 = scalar_lea.hbm %s3, %s309
          %s311 = sshll.u32 %s302, 4
          %s312 = int_to_ptr.vmem [resolvable:$true] %s311
          %317 = dma.vmem_to_hbm [thread:$0]  %s312, 512, %s310, %s299, 128, 256, 8
        $region70: #{tpu_custom_call.1} parent=61 // pred_fallthru
          _
      $region62: #{tpu_custom_call.1} parent=5 // pred_fallthru
        _
      %p318 = scmp.le.s32.totalorder 2, %s18
      // Predicated region
      $region71: #{tpu_custom_call.1} parent=5 // pred_check
        %p319 = pneg %p318
      $region72: #{tpu_custom_call.1} parent=5 // pred_check_branch
        %321 = sbr.rel (%p319) target = $region74
      $region73: #{tpu_custom_call.1} parent=5 // pred_region
        %s322 = ssub.s32 %s18, 2
        // Predicated region
        $region75: #{tpu_custom_call.1} parent=73 // pred_check
          %p323 = pneg %p94
        $region76: #{tpu_custom_call.1} parent=73 // pred_check_branch
          %325 = sbr.rel (%p323) target = $region78
        $region77: #{tpu_custom_call.1} parent=73 // pred_region
          %s326 = sand.u32 %s79, 1
          %s327 = scalar_lea.sflag [#allocation6], %s326
          %s328 = sand.u32 %s79, 1
          %s329 = smul.addr %s328, 32
          %s330 = scalar_lea.vmem [#allocation5], %s329
          %331 = dma.done %s327, 512
        $region78: #{tpu_custom_call.1} parent=73 // pred_fallthru
          _
      $region74: #{tpu_custom_call.1} parent=5 // pred_fallthru
        _
    $region6: #{tpu_custom_call.1} parent=1 // loop_footer
      %s22 = sadd.s32 1, %s18
    $region7: #{tpu_custom_call.1} parent=1 // loop_footer_branch
      %17 = sbr.rel target = $region3
    $region8: #{tpu_custom_call.1} parent=1 // loop_exit
      _
    %332 = vsyncpa [#allocation6], 1
    %s333 = scalar_lea.sflag [#allocation6], 1
    %334 = vsyncpa %s333, 1

</llo_original>
